<compile_context>
chip_gen: v6e
topology: v6e:2x2x1
jax: 0.10.0
libtpu: 0.0.40
codegen_flags: <defaults>
</compile_context>

<pallas_src>
import jax
import jax.numpy as jnp
from jax import lax
from jax.experimental import pallas as pl
from jax.experimental.pallas import tpu as pltpu


def _round_up(n, m):
    return (n + m - 1) // m * m


def _cdiv(a, b):
    return (a + b - 1) // b


def _pick_tile(s, align, cap):
    """Tile size (multiple of `align`, <= cap) minimizing total padding."""
    cap = max(align, cap // align * align)
    s_al = _round_up(max(s, 1), align)
    if s_al <= cap:
        return s_al
    candidates = range(align, cap + 1, align)
    return min(candidates, key=lambda t: (_round_up(s_al, t), -t))


def _sublane_align(dtype):
    # Native packed sublane tile: 8 rows for 4-byte, 16 for 2-byte, 32 for 1-byte.
    return {4: 8, 2: 16, 1: 32}.get(jnp.dtype(dtype).itemsize, 8)


def _vmem_capacity_bytes():
    try:
        info = pltpu.get_tpu_info()
        cap = int(getattr(info, "vmem_capacity_bytes", 0) or 0)
        if cap > 0:
            return cap
    except Exception:
        pass
    return 64 * 1024 * 1024  # conservative fallback (v7x per-TensorCore VMEM)


def _make_kernel(o_tile):
    def kernel(x_ref, w_ref, y_ref, row_ref, col_ref, o_ref, xw_ref):
        # x_ref:   (tx, Ip)            resident across (og, j)
        # w_ref:   (o_tile, Ip, Jp)    resident across j (constant when n_og == 1)
        # y_ref:   (ty, Jp)            streamed over j
        # row_ref: (o_tile, ty)  f32   bias_x term (+ corner), broadcast over rows
        # col_ref: (tx, o_tile)  f32   bias_y term, broadcast over columns
        # o_ref:   (o_tile, tx, ty) or (tx, ty) when n_out == 1
        # xw_ref:  (o_tile, tx, Jp)    VMEM scratch caching x @ W[o] across j
        @pl.when(pl.program_id(3) == 0)
        def _compute_xw():
            x = x_ref[...]
            for o in range(o_tile):
                xw = jnp.dot(x, w_ref[o], preferred_element_type=jnp.float32)
                xw_ref[o] = xw.astype(xw_ref.dtype)

        y = y_ref[...]
        out_is_3d = len(o_ref.shape) == 3
        for o in range(o_tile):
            # Contract the last axes of xw and y directly (no transpose / XLU work).
            s = lax.dot_general(xw_ref[o], y, (((1,), (1,)), ((), ())),
                                preferred_element_type=jnp.float32)
            # Rank-1 bias corrections (padded rows/cols may pick up bias garbage;
            # they are sliced off in the wrapper).
            s = s + row_ref[o:o + 1, :] + col_ref[:, o:o + 1]
            if out_is_3d:
                o_ref[o] = s.astype(o_ref.dtype)
            else:
                o_ref[...] = s.astype(o_ref.dtype)

    return kernel


def biaffine_forward(x, y, weight, *, bias_x=True, bias_y=True,
                     o_unroll_cap=16, max_tile_x=None, max_tile_y=None,
                     vmem_limit_bytes=None):
    """Pallas implementation of Biaffine.forward.

    x: (B, Sx, n_in), y: (B, Sy, n_in),
    weight: (n_out, n_in + bias_x, n_in + bias_y)
    returns (B, n_out, Sx, Sy), with dim 1 squeezed if n_out == 1
    (matches torch `s.squeeze(1)`).
    """
    B, Sx, n_in = x.shape
    By, Sy, n_in_y = y.shape
    assert B == By and n_in == n_in_y, (x.shape, y.shape)
    n_out, I, J = weight.shape
    assert I == n_in + int(bias_x) and J == n_in + int(bias_y), (
        weight.shape, (n_in, bias_x, bias_y))

    compute_dtype = x.dtype
    out_dtype = x.dtype
    if y.dtype != compute_dtype:
        y = y.astype(compute_dtype)
    # bf16 inputs: keep both MXU operands of the second matmul bf16 (f32 acc);
    # documented extra rounding vs a full-f32 chain.
    mm_dtype = jnp.bfloat16 if compute_dtype == jnp.bfloat16 else jnp.float32
    f32 = jnp.float32

    # The bias is handled algebraically, so the contraction dim never gets
    # inflated past round_up(n_in, 128).
    Ip = _round_up(n_in, 128)
    Jp = _round_up(n_in, 128)

    isz = jnp.dtype(compute_dtype).itemsize
    msz = jnp.dtype(mm_dtype).itemsize
    osz = jnp.dtype(out_dtype).itemsize
    sub_align = _sublane_align(compute_dtype)

    if vmem_limit_bytes is None:
        cap = _vmem_capacity_bytes()            # 128 MiB on v5e/v6e, 64 MiB on v7x
        vmem_limit_bytes = max(32 * 1024 * 1024, int(cap * 0.8))
    budget = int(vmem_limit_bytes * 0.85)       # headroom for Mosaic internals

    def footprint(tx, ty, o_tile):
        b = 2 * o_tile * Ip * Jp * isz          # weight (planned double-buffered)
        b += 2 * tx * Ip * isz                  # x blocks
        b += 2 * ty * Jp * isz                  # y blocks
        b += 2 * o_tile * tx * ty * osz         # output blocks
        b += o_tile * tx * Jp * msz             # xw scratch (single buffer)
        b += 2 * _round_up(o_tile, 8) * ty * 4          # row bias term
        b += 2 * tx * _round_up(o_tile, 128) * 4        # col bias term (lane pad)
        return b

    cap_x0 = min(2048, max_tile_x) if max_tile_x else 2048
    cap_y0 = min(2048, max_tile_y) if max_tile_y else 2048

    # Plan (o_tile, tx, ty): keep the weight group as large as the unroll cap /
    # VMEM budget allow, but do not crush the MXU tiles below ~256 to do so.
    o_cap = max(1, min(n_out, o_unroll_cap))
    while True:
        n_og = _cdiv(n_out, o_cap)
        o_tile = _cdiv(n_out, n_og)
        cap_x, cap_y = cap_x0, cap_y0
        tx = _pick_tile(Sx, sub_align, cap_x)
        ty = _pick_tile(Sy, 128, cap_y)
        budget_ok = footprint(tx, ty, o_tile) <= budget
        degraded = False
        while not budget_ok:
            if ty > 256:
                cap_y = max(128, ty // 2)
                ty = _pick_tile(Sy, 128, cap_y)
            elif tx > 256:
                cap_x = max(sub_align, tx // 2)
                tx = _pick_tile(Sx, sub_align, cap_x)
            elif ty > 128:
                cap_y = 128
                ty = _pick_tile(Sy, 128, cap_y)
            elif tx > sub_align:
                cap_x = max(sub_align, tx // 2)
                tx = _pick_tile(Sx, sub_align, cap_x)
            else:
                break
            degraded = True
            budget_ok = footprint(tx, ty, o_tile) <= budget
        tiles_ok = (not degraded) or (
            tx >= min(256, _round_up(Sx, sub_align))
            and ty >= min(256, _round_up(Sy, 128)))
        if (budget_ok and tiles_ok) or o_tile == 1:
            break
        o_cap = max(1, o_tile // 2)
    n_out_p = n_og * o_tile

    Sxp = _round_up(Sx, tx)
    Syp = _round_up(Sy, ty)
    n_i = Sxp // tx
    n_j = Syp // ty

    # ------------------------------------------------------------------ data
    # Avoid a wrapper pad pass (full extra HBM read+write) when nothing
    # actually needs padding.
    if Sxp == Sx and Ip == n_in:
        x_p = x
    else:
        x_p = jnp.pad(x, ((0, 0), (0, Sxp - Sx), (0, Ip - n_in)))
    if Syp == Sy and Jp == n_in:
        y_p = y
    else:
        y_p = jnp.pad(y, ((0, 0), (0, Syp - Sy), (0, Jp - n_in)))

    w_core = weight[:, :n_in, :n_in].astype(compute_dtype)
    if (n_out_p, Ip, Jp) == w_core.shape:
        w_p = w_core
    else:
        w_p = jnp.zeros((n_out_p, Ip, Jp), compute_dtype)
        w_p = w_p.at[:n_out, :n_in, :n_in].set(w_core)

    # Rank-1 bias terms (tiny vs. the main contraction), added in-kernel:
    #   s = x Wc y^T + colterm[..., :, None] + rowterm[..., None, :]
    rowterm = jnp.zeros((B, n_out_p, Syp), f32)
    if bias_x:
        rt = jnp.einsum('oj,byj->boy',
                        weight[:, n_in, :n_in].astype(compute_dtype), y,
                        preferred_element_type=f32)
        if bias_y:
            rt = rt + weight[:, n_in, n_in].astype(f32)[None, :, None]
        rowterm = rowterm.at[:, :n_out, :Sy].set(rt.astype(f32))
    rowterm = rowterm.reshape(B, n_og, o_tile, Syp)

    colterm = jnp.zeros((B, n_out_p, Sxp), f32)
    if bias_y:
        ct = jnp.einsum('bxi,oi->box',
                        x, weight[:, :n_in, n_in].astype(compute_dtype),
                        preferred_element_type=f32)
        colterm = colterm.at[:, :n_out, :Sx].set(ct.astype(f32))
    colterm = colterm.reshape(B, n_og, o_tile, Sxp).transpose(0, 1, 3, 2)

    # ----------------------------------------------------------------- specs
    # Grid (i, b, og, j):
    #   * x block depends only on (b, i)  -> read exactly once overall,
    #   * W block depends only on og      -> read once when n_og == 1,
    #   * y streams over j (re-read n_i * n_og times),
    #   * j is the reduction-like axis for the xw scratch -> "arbitrary".
    x_spec = pl.BlockSpec((None, tx, Ip), lambda i, b, og, j: (b, i, 0))
    y_spec = pl.BlockSpec((None, ty, Jp), lambda i, b, og, j: (b, j, 0))
    row_spec = pl.BlockSpec((None, None, o_tile, ty),
                            lambda i, b, og, j: (b, og, 0, j))
    col_spec = pl.BlockSpec((None, None, tx, o_tile),
                            lambda i, b, og, j: (b, og, i, 0))

    w_block = (o_tile, Ip, Jp)
    w_index = lambda i, b, og, j: (og, 0, 0)
    w_spec = pl.BlockSpec(w_block, w_index)
    w_blk_bytes = o_tile * Ip * Jp * isz
    if hasattr(pl, "Buffered") and 2 * w_blk_bytes > budget // 4:
        # The weight is fetched only n_og (usually 1) times over the whole grid,
        # so single-buffering it costs nothing and halves its VMEM footprint
        # (matters on v7x's 64 MiB VMEM for large n_in).
        try:
            w_spec = pl.BlockSpec(w_block, w_index, pipeline_mode=pl.Buffered(1))
        except TypeError:
            pass

    if n_out == 1:
        out_shape = jax.ShapeDtypeStruct((B, Sxp, Syp), out_dtype)
        out_spec = pl.BlockSpec((None, tx, ty), lambda i, b, og, j: (b, i, j))
    else:
        out_shape = jax.ShapeDtypeStruct((B, n_out_p, Sxp, Syp), out_dtype)
        out_spec = pl.BlockSpec((None, o_tile, tx, ty),
                                lambda i, b, og, j: (b, og, i, j))

    grid = (n_i, B, n_og, n_j)

    out = pl.pallas_call(
        _make_kernel(o_tile),
        out_shape=out_shape,
        grid_spec=pltpu.PrefetchScalarGridSpec(
            num_scalar_prefetch=0,
            grid=grid,
            in_specs=[x_spec, w_spec, y_spec, row_spec, col_spec],
            out_specs=out_spec,
            scratch_shapes=[pltpu.VMEM((o_tile, tx, Jp), mm_dtype)],
        ),
        compiler_params=pltpu.CompilerParams(
            dimension_semantics=("parallel", "parallel", "parallel", "arbitrary"),
            vmem_limit_bytes=int(vmem_limit_bytes),
        ),
    )(x_p, w_p, y_p, rowterm, colterm)

    # Slice the n_out / Sx / Sy padding back off.
    if n_out == 1:
        return out[:, :Sx, :Sy]
    return out[:, :n_out, :Sx, :Sy]


def _reference(x, y, weight, *, bias_x=True, bias_y=True):
    if bias_x:
        x = jnp.concatenate([x, jnp.ones_like(x[..., :1])], axis=-1)
    if bias_y:
        y = jnp.concatenate([y, jnp.ones_like(y[..., :1])], axis=-1)
    s = jnp.einsum('bxi,oij,byj->boxy', x, weight, y)
    if weight.shape[0] == 1:
        s = jnp.squeeze(s, axis=1)
    return s


if __name__ == "__main__":
    key = jax.random.PRNGKey(0)
    kx, ky, kw1, kw4, kx3, ky3, kw3 = jax.random.split(key, 7)

    # Small shapes consistent with the module: batch=2, seq=8, n_in=32.
    B, S, n_in = 2, 8, 32
    x = jax.random.normal(kx, (B, S, n_in), dtype=jnp.float32)
    y = jax.random.normal(ky, (B, S, n_in), dtype=jnp.float32)

    # NOTE: torch's reset_parameters() zero-inits the weight (trivially zero
    # output); use a deterministic random init with the documented shape so the
    # kernel is exercised meaningfully.
    w1 = 0.1 * jax.random.normal(kw1, (1, n_in + 1, n_in + 1), dtype=jnp.float32)
    w4 = 0.1 * jax.random.normal(kw4, (4, n_in + 1, n_in + 1), dtype=jnp.float32)

    # n_out == 1 path (squeezed output, arc-style biaffine).
    out1 = jax.block_until_ready(biaffine_forward(x, y, w1))
    ref1 = _reference(x, y, w1)
    assert out1.shape == ref1.shape, (out1.shape, ref1.shape)
    assert jnp.allclose(out1, ref1, atol=1e-4, rtol=1e-4)

    # n_out > 1 path (label-style biaffine), weight fully resident in VMEM.
    out4 = jax.block_until_ready(biaffine_forward(x, y, w4))
    ref4 = _reference(x, y, w4)
    assert out4.shape == ref4.shape, (out4.shape, ref4.shape)
    assert jnp.allclose(out4, ref4, atol=1e-4, rtol=1e-4)

    # Exercise multi-tile Sx/Sy (xw-cache reuse across j), o-grouping (n_og > 1)
    # and a disabled bias flag, by forcing small tile caps / unroll cap.
    Sx3, Sy3, n_out3 = 40, 200, 3
    x3 = jax.random.normal(kx3, (B, Sx3, n_in), dtype=jnp.float32)
    y3 = jax.random.normal(ky3, (B, Sy3, n_in), dtype=jnp.float32)
    w3 = 0.1 * jax.random.normal(kw3, (n_out3, n_in + 1, n_in), dtype=jnp.float32)
    out3 = jax.block_until_ready(
        biaffine_forward(x3, y3, w3, bias_x=True, bias_y=False,
                         o_unroll_cap=2, max_tile_x=16, max_tile_y=128))
    ref3 = _reference(x3, y3, w3, bias_x=True, bias_y=False)
    assert out3.shape == ref3.shape, (out3.shape, ref3.shape)
    assert jnp.allclose(out3, ref3, atol=1e-4, rtol=1e-4)

    print("KERNEL_OK")
</pallas_src>

<mosaic_0001>
module attributes {stable_mosaic.version = 11 : i64} {
  func.func @kernel(%arg0: i32, %arg1: i32, %arg2: i32, %arg3: i32, %arg4: memref<1x8x128xf32, #tpu.memory_space<vmem>>, %arg5: memref<1x128x128xf32, #tpu.memory_space<vmem>>, %arg6: memref<1x128x128xf32, #tpu.memory_space<vmem>>, %arg7: memref<1x1x1x128xf32, #tpu.memory_space<vmem>>, %arg8: memref<1x1x8x1xf32, #tpu.memory_space<vmem>>, %arg9: memref<1x8x128xf32, #tpu.memory_space<vmem>>, %arg10: memref<1x8x128xf32, #tpu.memory_space<vmem>>) attributes {dimension_semantics = [#tpu.dimension_semantics<parallel>, #tpu.dimension_semantics<parallel>, #tpu.dimension_semantics<parallel>, #tpu.dimension_semantics<arbitrary>], iteration_bounds = array<i64: 1, 2, 1, 1>, scalar_prefetch = 0 : i64, scratch_operands = 1 : i64, tpu.core_type = #tpu.core_type<tc>, window_params = [{transform_indices = @transform_0, window_bounds = array<i64: 1, 8, 128>}, {transform_indices = @transform_1, window_bounds = array<i64: 1, 128, 128>}, {transform_indices = @transform_2, window_bounds = array<i64: 1, 128, 128>}, {transform_indices = @transform_3, window_bounds = array<i64: 1, 1, 1, 128>}, {transform_indices = @transform_4, window_bounds = array<i64: 1, 1, 8, 1>}, {transform_indices = @transform_5, window_bounds = array<i64: 1, 8, 128>}]} {
    %c0_i32 = arith.constant 0 : i32
    %0 = arith.cmpi eq, %arg3, %c0_i32 : i32
    %1 = arith.extui %0 : i1 to i32
    %c0_i32_0 = arith.constant 0 : i32
    %2 = arith.cmpi ne, %1, %c0_i32_0 : i32
    scf.if %2 {
      %c0_17 = arith.constant 0 : index
      %c0_18 = arith.constant 0 : index
      %c0_19 = arith.constant 0 : index
      %19 = vector.load %arg4[%c0_17, %c0_18, %c0_19] : memref<1x8x128xf32, #tpu.memory_space<vmem>>, vector<1x8x128xf32>
      %20 = vector.shape_cast %19 : vector<1x8x128xf32> to vector<8x128xf32>
      %c0_20 = arith.constant 0 : index
      %c0_21 = arith.constant 0 : index
      %c0_22 = arith.constant 0 : index
      %21 = vector.load %arg5[%c0_20, %c0_21, %c0_22] : memref<1x128x128xf32, #tpu.memory_space<vmem>>, vector<1x128x128xf32>
      %22 = vector.shape_cast %21 : vector<1x128x128xf32> to vector<128x128xf32>
      %cst_23 = arith.constant dense<0.000000e+00> : vector<8x128xf32>
      %23 = tpu.matmul %20, %22, %cst_23 {dimension_numbers = #tpu.dot_dimension_numbers<[1], [0], [0], [1], [0, 0, 1, 1], [], []>} : vector<8x128xf32>, vector<128x128xf32>, vector<8x128xf32> -> vector<8x128xf32>
      %c0_24 = arith.constant 0 : index
      %c0_25 = arith.constant 0 : index
      %c0_26 = arith.constant 0 : index
      %24 = vector.load %arg10[%c0_24, %c0_25, %c0_26] : memref<1x8x128xf32, #tpu.memory_space<vmem>>, vector<1x8x128xf32>
      %25 = vector.shape_cast %24 : vector<1x8x128xf32> to vector<8x128xf32>
      %26 = vector.shape_cast %23 : vector<8x128xf32> to vector<1x8x128xf32>
      tpu.vector_store %arg10[%c0_24, %c0_25, %c0_26], %26 {strides = array<i32>} : memref<1x8x128xf32, #tpu.memory_space<vmem>>, vector<1x8x128xf32>,
    } else {
    }
    %c0 = arith.constant 0 : index
    %c0_1 = arith.constant 0 : index
    %c0_2 = arith.constant 0 : index
    %3 = vector.load %arg6[%c0, %c0_1, %c0_2] : memref<1x128x128xf32, #tpu.memory_space<vmem>>, vector<1x128x128xf32>
    %4 = vector.shape_cast %3 : vector<1x128x128xf32> to vector<128x128xf32>
    %c0_3 = arith.constant 0 : index
    %c0_4 = arith.constant 0 : index
    %c0_5 = arith.constant 0 : index
    %5 = vector.load %arg10[%c0_3, %c0_4, %c0_5] : memref<1x8x128xf32, #tpu.memory_space<vmem>>, vector<1x8x128xf32>
    %6 = vector.shape_cast %5 : vector<1x8x128xf32> to vector<8x128xf32>
    %cst = arith.constant dense<0.000000e+00> : vector<8x128xf32>
    %7 = tpu.matmul %6, %4, %cst {dimension_numbers = #tpu.dot_dimension_numbers<[1], [1], [0], [0], [0, 0, 1, 0], [], []>} : vector<8x128xf32>, vector<128x128xf32>, vector<8x128xf32> -> vector<8x128xf32>
    %c0_6 = arith.constant 0 : index
    %c0_7 = arith.constant 0 : index
    %c0_8 = arith.constant 0 : index
    %c0_9 = arith.constant 0 : index
    %8 = vector.load %arg7[%c0_6, %c0_7, %c0_8, %c0_9] : memref<1x1x1x128xf32, #tpu.memory_space<vmem>>, vector<1x1x1x128xf32>
    %9 = vector.shape_cast %8 : vector<1x1x1x128xf32> to vector<1x128xf32>
    %10 = vector.broadcast %9 : vector<1x128xf32> to vector<8x128xf32>
    %11 = arith.addf %7, %10 : vector<8x128xf32>
    %c0_10 = arith.constant 0 : index
    %c0_11 = arith.constant 0 : index
    %c0_12 = arith.constant 0 : index
    %c0_13 = arith.constant 0 : index
    %12 = vector.load %arg8[%c0_10, %c0_11, %c0_12, %c0_13] : memref<1x1x8x1xf32, #tpu.memory_space<vmem>>, vector<1x1x8x1xf32>
    %13 = vector.shape_cast %12 : vector<1x1x8x1xf32> to vector<8x1xf32>
    %14 = vector.broadcast %13 : vector<8x1xf32> to vector<8x128xf32>
    %15 = arith.addf %11, %14 : vector<8x128xf32>
    %c0_14 = arith.constant 0 : index
    %c0_15 = arith.constant 0 : index
    %c0_16 = arith.constant 0 : index
    %16 = vector.load %arg9[%c0_14, %c0_15, %c0_16] : memref<1x8x128xf32, #tpu.memory_space<vmem>>, vector<1x8x128xf32>
    %17 = vector.shape_cast %16 : vector<1x8x128xf32> to vector<8x128xf32>
    %18 = vector.shape_cast %15 : vector<8x128xf32> to vector<1x8x128xf32>
    tpu.vector_store %arg9[%c0_14, %c0_15, %c0_16], %18 {strides = array<i32>} : memref<1x8x128xf32, #tpu.memory_space<vmem>>, vector<1x8x128xf32>,
    return
  }
  func.func @transform_0(%arg0: i32, %arg1: i32, %arg2: i32, %arg3: i32) -> (i32, i32, i32) {
    %c0_i32 = arith.constant 0 : i32
    %c0_i32_0 = arith.constant 0 : i32
    return %arg1, %arg0, %c0_i32 : i32, i32, i32
  }
  func.func @transform_1(%arg0: i32, %arg1: i32, %arg2: i32, %arg3: i32) -> (i32, i32, i32) {
    %c0_i32 = arith.constant 0 : i32
    %c0_i32_0 = arith.constant 0 : i32
    %c0_i32_1 = arith.constant 0 : i32
    return %arg2, %c0_i32, %c0_i32_0 : i32, i32, i32
  }
  func.func @transform_2(%arg0: i32, %arg1: i32, %arg2: i32, %arg3: i32) -> (i32, i32, i32) {
    %c0_i32 = arith.constant 0 : i32
    %c0_i32_0 = arith.constant 0 : i32
    return %arg1, %arg3, %c0_i32 : i32, i32, i32
  }
  func.func @transform_3(%arg0: i32, %arg1: i32, %arg2: i32, %arg3: i32) -> (i32, i32, i32, i32) {
    %c0_i32 = arith.constant 0 : i32
    %c0_i32_0 = arith.constant 0 : i32
    return %arg1, %arg2, %c0_i32, %arg3 : i32, i32, i32, i32
  }
  func.func @transform_4(%arg0: i32, %arg1: i32, %arg2: i32, %arg3: i32) -> (i32, i32, i32, i32) {
    %c0_i32 = arith.constant 0 : i32
    %c0_i32_0 = arith.constant 0 : i32
    return %arg1, %arg2, %arg0, %c0_i32 : i32, i32, i32, i32
  }
  func.func @transform_5(%arg0: i32, %arg1: i32, %arg2: i32, %arg3: i32) -> (i32, i32, i32) {
    %c0_i32 = arith.constant 0 : i32
    return %arg1, %arg0, %arg3 : i32, i32, i32
  }
}

</mosaic_0001>

<llo_original>
// kernel: tpu_custom_call.1
$region0: #{tpu_custom_call.1}
  #allocation0 [shape = 'u32[]', space=smem, size = 0x4, offset = 0x4, fixed_abs, tag = 'smem constant byte address 0x4 - core index']
  #allocation1 [shape = 'u32[144,128]{1,0:T(1,128)}', space=vmem, size = 0x12000, scoped, tag = 'internal scratch']
  #allocation2 [shape = 'f32[1,8,128]{2,1,0:T(8,128)}', space=vmem, size = 0x1000, scoped, tag = 'scratch operand']
  %s0 = inlined_call_operand.vmem [shape: f32[2,8,128], index: 0, kind: input, shape index: {}]
  %s1 = inlined_call_operand.hbm [shape: f32[1,128,128], index: 1, kind: input, shape index: {}]
  %s2 = inlined_call_operand.hbm [shape: f32[2,128,128], index: 2, kind: input, shape index: {}]
  %s3 = inlined_call_operand.vmem [shape: f32[2,1,1,128], index: 3, kind: input, shape index: {}]
  %s4 = inlined_call_operand.vmem [shape: f32[2,1,8,1], index: 4, kind: input, shape index: {}]
  %s5 = inlined_call_operand.hbm [shape: f32[2,8,128], index: 5, kind: output, shape index: {}]
  %s6 = sld [smem:[#allocation0]]
  $region65: #{tpu_custom_call.1} parent=0
    _
  %s8 = ssub.s32 1, %s6
  %s9 = scalar_select 0, %s8, %s6
  $region1: #{tpu_custom_call.1} parent=0
    #allocation3 [shape = 'u8[65536]{0}', space=vmem, size = 0x10000, scoped, tag = 'input window, operand 1, single buffered']
    #allocation4 [shape = 's32[2]{0}', space=sflag, size = 0x8, scoped, tag = 'scoped memory for tpu_custom_call.1']
    #allocation5 [shape = 's32[2]{0}', space=sflag, size = 0x8, scoped, tag = 'scoped memory for tpu_custom_call.1']
    #allocation6 [shape = 'u8[131072]{0}', space=vmem, size = 0x20000, scoped, tag = 'input window, operand 2']
    #allocation7 [shape = 's32[2]{0}', space=sflag, size = 0x8, scoped, tag = 'scoped memory for tpu_custom_call.1']
    #allocation8 [shape = 'u8[8192]{0}', space=vmem, size = 0x2000, scoped, tag = 'output window, operand 0']
    %10 = vsyncpa [#allocation4], 0
    %11 = vsyncpa [#allocation7], 0
    %s12 = scalar_lea.sflag [#allocation7], 1
    %13 = vsyncpa %s12, 0
    %14 = vsyncpa [#allocation5], 0
    %s15 = scalar_lea.sflag [#allocation5], 1
    %16 = vsyncpa %s15, 0
    loop: start=0, step=1, limit=4
    $region2: #{tpu_custom_call.1} parent=1 // loop_pre_header
      _
    $region3: #{tpu_custom_call.1} parent=1 // loop_header
      %s18 = sphi 0, %s22
      %p19 = scmp.ge.s32.totalorder %s18, 4
      %s25 = sphi 0, %s51
      %s26 = sphi 0, %s47
      %s27 = sphi 0, %s43
      %s28 = sphi 0, %s39
      %s29 = sphi 0, %s25
      %s30 = sphi 0, %s26
      %s31 = sphi 0, %s27
      %s32 = sphi 0, %s28
      %s33 = sphi 0, %s29
      %s34 = sphi 0, %s30
      %s35 = sphi 0, %s31
      %s36 = sphi 0, %s32
      %s56 = sphi 0, %s58
      %s59 = sphi 0, %s56
      %s60 = sphi 0, %s59
      %s76 = sphi 0, %s60
      %s82 = sphi 0, %s84
      %s85 = sphi 0, %s82
      %s86 = sphi 0, %s85
      %s102 = sphi 0, %s86
      %s110 = sphi 0, %s112
      %s113 = sphi 0, %s110
      %s114 = sphi 0, %s113
      %s130 = sphi 0, %s114
      %s140 = sphi 0, %s142
      %s143 = sphi 0, %s140
      %s144 = sphi 0, %s143
      %s160 = sphi 0, %s144
      %s170 = sphi 0, %s172
      %s173 = sphi 0, %s170
      %s174 = sphi 0, %s173
      %s190 = sphi 0, %s174
      %s200 = sphi 0, %s202
      %s203 = sphi 0, %s200
      %s204 = sphi 0, %s203
      %s220 = sphi 0, %s204
    $region4: #{tpu_custom_call.1} parent=1 // loop_header_branch
      %21 = sbr.rel (%p19) target = $region8
    $region5: #{tpu_custom_call.1} parent=1 // loop_body
      %s23 = ssub.s32 %s18, 1
      %s24 = ssub.s32 %s18, 2
      %s37 = sadd.s32 1, %s28
      %p38 = scmp.ge.s32.totalorder %s37, 1
      %s39 = scalar_select %p38, 0, %s37
      %s40 = sadd.s32 1, %s27
      %s41 = scalar_select %p38, %s40, %s27
      %p42 = scmp.ge.s32.totalorder %s41, 1
      %s43 = scalar_select %p42, 0, %s41
      %s44 = sadd.s32 1, %s26
      %s45 = scalar_select %p42, %s44, %s26
      %p46 = scmp.ge.s32.totalorder %s45, 2
      %s47 = scalar_select %p46, 0, %s45
      %s48 = sadd.s32 1, %s25
      %s49 = scalar_select %p46, %s48, %s25
      %p50 = scmp.ge.s32.totalorder %s49, 1
      %s51 = scalar_select %p50, 0, %s49
      %s52 = ssub.s32 %s26, %s47
      %s53 = ssub.s32 %s25, %s51
      %s54 = sor.u32 %s52, %s53
      %p55 = scmp.eq.s32.totalorder %s54, 0
      %s57 = sadd.s32 %s56, 1
      %s58 = scalar_select %p55, %s56, %s57
      %p61 = pneg %p55
      %p62 = scmp.eq.s32.totalorder %s18, 1
      %p63 = por %p61, %p62
      %p64 = scmp.ne.s32.totalorder %s56, %s59
      %p65 = scmp.eq.s32.totalorder %s18, 0
      %p66 = por %p64, %p65
      %p67 = scmp.ne.s32.totalorder %s56, %s59
      %p68 = scmp.eq.s32.totalorder %s23, 1
      %p69 = por %p67, %p68
      %p70 = scmp.ne.s32.totalorder %s59, %s60
      %p71 = scmp.eq.s32.totalorder %s23, 0
      %p72 = por %p70, %p71
      %p73 = scmp.ne.s32.totalorder %s59, %s60
      %p74 = scmp.eq.s32.totalorder %s24, 1
      %p75 = por %p73, %p74
      %p77 = scmp.ne.s32.totalorder %s60, %s76
      %p78 = scmp.eq.s32.totalorder %s24, 0
      %p79 = por %p77, %p78
      %s80 = ssub.s32 %s27, %s43
      %p81 = scmp.eq.s32.totalorder %s80, 0
      %s83 = sadd.s32 %s82, 1
      %s84 = scalar_select %p81, %s82, %s83
      %p87 = pneg %p81
      %p88 = scmp.eq.s32.totalorder %s18, 1
      %p89 = por %p87, %p88
      %p90 = scmp.ne.s32.totalorder %s82, %s85
      %p91 = scmp.eq.s32.totalorder %s18, 0
      %p92 = por %p90, %p91
      %p93 = scmp.ne.s32.totalorder %s82, %s85
      %p94 = scmp.eq.s32.totalorder %s23, 1
      %p95 = por %p93, %p94
      %p96 = scmp.ne.s32.totalorder %s85, %s86
      %p97 = scmp.eq.s32.totalorder %s23, 0
      %p98 = por %p96, %p97
      %p99 = scmp.ne.s32.totalorder %s85, %s86
      %p100 = scmp.eq.s32.totalorder %s24, 1
      %p101 = por %p99, %p100
      %p103 = scmp.ne.s32.totalorder %s86, %s102
      %p104 = scmp.eq.s32.totalorder %s24, 0
      %p105 = por %p103, %p104
      %s106 = ssub.s32 %s26, %s47
      %s107 = ssub.s32 %s28, %s39
      %s108 = sor.u32 %s106, %s107
      %p109 = scmp.eq.s32.totalorder %s108, 0
      %s111 = sadd.s32 %s110, 1
      %s112 = scalar_select %p109, %s110, %s111
      %p115 = pneg %p109
      %p116 = scmp.eq.s32.totalorder %s18, 1
      %p117 = por %p115, %p116
      %p118 = scmp.ne.s32.totalorder %s110, %s113
      %p119 = scmp.eq.s32.totalorder %s18, 0
      %p120 = por %p118, %p119
      %p121 = scmp.ne.s32.totalorder %s110, %s113
      %p122 = scmp.eq.s32.totalorder %s23, 1
      %p123 = por %p121, %p122
      %p124 = scmp.ne.s32.totalorder %s113, %s114
      %p125 = scmp.eq.s32.totalorder %s23, 0
      %p126 = por %p124, %p125
      %p127 = scmp.ne.s32.totalorder %s113, %s114
      %p128 = scmp.eq.s32.totalorder %s24, 1
      %p129 = por %p127, %p128
      %p131 = scmp.ne.s32.totalorder %s114, %s130
      %p132 = scmp.eq.s32.totalorder %s24, 0
      %p133 = por %p131, %p132
      %s134 = ssub.s32 %s26, %s47
      %s135 = ssub.s32 %s27, %s43
      %s136 = sor.u32 %s134, %s135
      %s137 = ssub.s32 %s28, %s39
      %s138 = sor.u32 %s136, %s137
      %p139 = scmp.eq.s32.totalorder %s138, 0
      %s141 = sadd.s32 %s140, 1
      %s142 = scalar_select %p139, %s140, %s141
      %p145 = pneg %p139
      %p146 = scmp.eq.s32.totalorder %s18, 1
      %p147 = por %p145, %p146
      %p148 = scmp.ne.s32.totalorder %s140, %s143
      %p149 = scmp.eq.s32.totalorder %s18, 0
      %p150 = por %p148, %p149
      %p151 = scmp.ne.s32.totalorder %s140, %s143
      %p152 = scmp.eq.s32.totalorder %s23, 1
      %p153 = por %p151, %p152
      %p154 = scmp.ne.s32.totalorder %s143, %s144
      %p155 = scmp.eq.s32.totalorder %s23, 0
      %p156 = por %p154, %p155
      %p157 = scmp.ne.s32.totalorder %s143, %s144
      %p158 = scmp.eq.s32.totalorder %s24, 1
      %p159 = por %p157, %p158
      %p161 = scmp.ne.s32.totalorder %s144, %s160
      %p162 = scmp.eq.s32.totalorder %s24, 0
      %p163 = por %p161, %p162
      %s164 = ssub.s32 %s26, %s47
      %s165 = ssub.s32 %s27, %s43
      %s166 = sor.u32 %s164, %s165
      %s167 = ssub.s32 %s25, %s51
      %s168 = sor.u32 %s166, %s167
      %p169 = scmp.eq.s32.totalorder %s168, 0
      %s171 = sadd.s32 %s170, 1
      %s172 = scalar_select %p169, %s170, %s171
      %p175 = pneg %p169
      %p176 = scmp.eq.s32.totalorder %s18, 1
      %p177 = por %p175, %p176
      %p178 = scmp.ne.s32.totalorder %s170, %s173
      %p179 = scmp.eq.s32.totalorder %s18, 0
      %p180 = por %p178, %p179
      %p181 = scmp.ne.s32.totalorder %s170, %s173
      %p182 = scmp.eq.s32.totalorder %s23, 1
      %p183 = por %p181, %p182
      %p184 = scmp.ne.s32.totalorder %s173, %s174
      %p185 = scmp.eq.s32.totalorder %s23, 0
      %p186 = por %p184, %p185
      %p187 = scmp.ne.s32.totalorder %s173, %s174
      %p188 = scmp.eq.s32.totalorder %s24, 1
      %p189 = por %p187, %p188
      %p191 = scmp.ne.s32.totalorder %s174, %s190
      %p192 = scmp.eq.s32.totalorder %s24, 0
      %p193 = por %p191, %p192
      %s194 = ssub.s32 %s26, %s47
      %s195 = ssub.s32 %s25, %s51
      %s196 = sor.u32 %s194, %s195
      %s197 = ssub.s32 %s28, %s39
      %s198 = sor.u32 %s196, %s197
      %p199 = scmp.eq.s32.totalorder %s198, 0
      %s201 = sadd.s32 %s200, 1
      %s202 = scalar_select %p199, %s200, %s201
      %p205 = pneg %p199
      %p206 = scmp.eq.s32.totalorder %s18, 1
      %p207 = por %p205, %p206
      %p208 = scmp.ne.s32.totalorder %s200, %s203
      %p209 = scmp.eq.s32.totalorder %s18, 0
      %p210 = por %p208, %p209
      %p211 = scmp.ne.s32.totalorder %s200, %s203
      %p212 = scmp.eq.s32.totalorder %s23, 1
      %p213 = por %p211, %p212
      %p214 = scmp.ne.s32.totalorder %s203, %s204
      %p215 = scmp.eq.s32.totalorder %s23, 0
      %p216 = por %p214, %p215
      %p217 = scmp.ne.s32.totalorder %s203, %s204
      %p218 = scmp.eq.s32.totalorder %s24, 1
      %p219 = por %p217, %p218
      %p221 = scmp.ne.s32.totalorder %s204, %s220
      %p222 = scmp.eq.s32.totalorder %s24, 0
      %p223 = por %p221, %p222
      %p224 = scmp.le.s32.totalorder 1, %s18
      %p225 = scmp.lt.s32.totalorder %s18, 3
      %p226 = pnand %p224, %p225
      %p227 = pneg %p226
      // Predicated region
      $region9: #{tpu_custom_call.1} parent=5 // pred_check
        _
      $region10: #{tpu_custom_call.1} parent=5 // pred_check_branch
        %229 = sbr.rel (%p226) target = $region12
      $region11: #{tpu_custom_call.1} parent=5 // pred_region
        %s230 = ssub.s32 %s18, 1
        // Predicated region
        $region13: #{tpu_custom_call.1} parent=11 // pred_check
          %p231 = pneg %p98
        $region14: #{tpu_custom_call.1} parent=11 // pred_check_branch
          %233 = sbr.rel (%p231) target = $region16
        $region15: #{tpu_custom_call.1} parent=11 // pred_region
          %s235 = ssub.s32 2048, 2048
          %236 = vsyncadd [#allocation4], %s235
          %s237 = smul.addr %s31, 16
          %s238 = smul.addr %s237, 128
          %s239 = scalar_lea.hbm %s1, %s238
          %s240 = sshll.u32 [#allocation3], 4
          %s241 = int_to_ptr.vmem [resolvable:$true] %s240
          %246 = dma.hbm_to_vmem [thread:$0]  %s239, 2048, %s241, [#allocation4], 128, 128, 8
        $region16: #{tpu_custom_call.1} parent=11 // pred_fallthru
          _
      $region12: #{tpu_custom_call.1} parent=5 // pred_fallthru
        _
      %p247 = scmp.lt.s32.totalorder %s18, 2
      // Predicated region
      $region17: #{tpu_custom_call.1} parent=5 // pred_check
        %p248 = pneg %p247
      $region18: #{tpu_custom_call.1} parent=5 // pred_check_branch
        %250 = sbr.rel (%p248) target = $region20
      $region19: #{tpu_custom_call.1} parent=5 // pred_region
        // Predicated region
        $region21: #{tpu_custom_call.1} parent=19 // pred_check
          %p251 = pneg %p66
        $region22: #{tpu_custom_call.1} parent=19 // pred_check_branch
          %253 = sbr.rel (%p251) target = $region24
        $region23: #{tpu_custom_call.1} parent=19 // pred_region
          %p254 = scmp.lt.s32.totalorder %s26, 1
          %s255 = scalar_select %p254, %s26, 1
          %p256 = scmp.lt.s32.totalorder %s25, 0
          %s257 = scalar_select %p256, %s25, 0
          %s258 = sadd.s32 %s257, %s255
          %s259 = smul.addr %s258, 8
          %s260 = scalar_lea.vmem %s0, %s259
        $region24: #{tpu_custom_call.1} parent=19 // pred_fallthru
          _
        // Predicated region
        $region25: #{tpu_custom_call.1} parent=19 // pred_check
          %p261 = pneg %p120
        $region26: #{tpu_custom_call.1} parent=19 // pred_check_branch
          %263 = sbr.rel (%p261) target = $region28
        $region27: #{tpu_custom_call.1} parent=19 // pred_region
          %s264 = sand.u32 %s110, 1
          %s265 = scalar_lea.sflag [#allocation7], %s264
          %s266 = sand.u32 %s110, 1
          %s267 = smul.addr %s266, 128
          %s268 = scalar_lea.vmem [#allocation6], %s267
          %s269 = smul.u32 16, %s28
          %s271 = ssub.s32 2048, 2048
          %272 = vsyncadd %s265, %s271
          %s273 = smul.addr %s26, 16
          %s274 = sadd.s32 %s269, %s273
          %s275 = smul.addr %s274, 128
          %s276 = scalar_lea.hbm %s2, %s275
          %s277 = sshll.u32 %s268, 4
          %s278 = int_to_ptr.vmem [resolvable:$true] %s277
          %283 = dma.hbm_to_vmem [thread:$0]  %s276, 2048, %s278, %s265, 128, 128, 8
        $region28: #{tpu_custom_call.1} parent=19 // pred_fallthru
          _
        // Predicated region
        $region29: #{tpu_custom_call.1} parent=19 // pred_check
          %p284 = pneg %p150
        $region30: #{tpu_custom_call.1} parent=19 // pred_check_branch
          %286 = sbr.rel (%p284) target = $region32
        $region31: #{tpu_custom_call.1} parent=19 // pred_region
          %p287 = scmp.lt.s32.totalorder %s26, 1
          %s288 = scalar_select %p287, %s26, 1
          %p289 = scmp.lt.s32.totalorder %s27, 0
          %s290 = scalar_select %p289, %s27, 0
          %p291 = scmp.lt.s32.totalorder %s28, 0
          %s292 = scalar_select %p291, %s28, 0
          %s293 = sadd.s32 %s292, %s290
          %s294 = sadd.s32 %s293, %s288
          %s295 = scalar_lea.vmem %s3, %s294
        $region32: #{tpu_custom_call.1} parent=19 // pred_fallthru
          _
        // Predicated region
        $region33: #{tpu_custom_call.1} parent=19 // pred_check
          %p296 = pneg %p180
        $region34: #{tpu_custom_call.1} parent=19 // pred_check_branch
          %298 = sbr.rel (%p296) target = $region36
        $region35: #{tpu_custom_call.1} parent=19 // pred_region
          %p299 = scmp.lt.s32.totalorder %s26, 1
          %s300 = scalar_select %p299, %s26, 1
          %p301 = scmp.lt.s32.totalorder %s27, 0
          %s302 = scalar_select %p301, %s27, 0
          %p303 = scmp.lt.s32.totalorder %s25, 0
          %s304 = scalar_select %p303, %s25, 0
          %s305 = sadd.s32 %s304, %s302
          %s306 = sadd.s32 %s305, %s300
          %s307 = smul.addr %s306, 8
          %s308 = scalar_lea.vmem %s4, %s307
        $region36: #{tpu_custom_call.1} parent=19 // pred_fallthru
          _
      $region20: #{tpu_custom_call.1} parent=5 // pred_fallthru
        _
      %p309 = scmp.le.s32.totalorder 1, %s18
      %p310 = scmp.lt.s32.totalorder %s18, 3
      %p311 = pnand %p309, %p310
      %p312 = pneg %p311
      // Predicated region
      $region37: #{tpu_custom_call.1} parent=5 // pred_check
        _
      $region38: #{tpu_custom_call.1} parent=5 // pred_check_branch
        %314 = sbr.rel (%p311) target = $region40
      $region39: #{tpu_custom_call.1} parent=5 // pred_region
        %s315 = ssub.s32 %s18, 1
        // Predicated region
        $region41: #{tpu_custom_call.1} parent=39 // pred_check
          %p316 = pneg %p98
        $region42: #{tpu_custom_call.1} parent=39 // pred_check_branch
          %318 = sbr.rel (%p316) target = $region44
        $region43: #{tpu_custom_call.1} parent=39 // pred_region
          %319 = dma.done [#allocation4], 2048
        $region44: #{tpu_custom_call.1} parent=39 // pred_fallthru
          _
        %s320 = sand.u32 %s113, 1
        %s321 = scalar_lea.sflag [#allocation7], %s320
        %s322 = sand.u32 %s113, 1
        %s323 = smul.addr %s322, 128
        %s324 = scalar_lea.vmem [#allocation6], %s323
        // Predicated region
        $region45: #{tpu_custom_call.1} parent=39 // pred_check
          %p325 = pneg %p126
        $region46: #{tpu_custom_call.1} parent=39 // pred_check_branch
          %327 = sbr.rel (%p325) target = $region48
        $region47: #{tpu_custom_call.1} parent=39 // pred_region
          %328 = dma.done %s321, 2048
        $region48: #{tpu_custom_call.1} parent=39 // pred_fallthru
          _
        %p329 = scmp.lt.s32.totalorder %s30, 1
        %s330 = scalar_select %p329, %s30, 1
        %p331 = scmp.lt.s32.totalorder %s29, 0
        %s332 = scalar_select %p331, %s29, 0
        %s333 = sadd.s32 %s332, %s330
        %s334 = smul.addr %s333, 8
        %s335 = scalar_lea.vmem %s0, %s334
        %p336 = pneg %p72
        %p337 = pneg %p69
        %p338 = pneg %p98
        %p339 = pneg %p95
        %s340 = sand.u32 %s113, 1
        %s341 = scalar_lea.sflag [#allocation7], %s340
        %s342 = sand.u32 %s113, 1
        %s343 = smul.addr %s342, 128
        %s344 = scalar_lea.vmem [#allocation6], %s343
        %p345 = pneg %p126
        %p346 = pneg %p123
        %p347 = scmp.lt.s32.totalorder %s30, 1
        %s348 = scalar_select %p347, %s30, 1
        %p349 = scmp.lt.s32.totalorder %s31, 0
        %s350 = scalar_select %p349, %s31, 0
        %p351 = scmp.lt.s32.totalorder %s32, 0
        %s352 = scalar_select %p351, %s32, 0
        %s353 = sadd.s32 %s352, %s350
        %s354 = sadd.s32 %s353, %s348
        %s355 = scalar_lea.vmem %s3, %s354
        %p356 = pneg %p156
        %p357 = pneg %p153
        %p358 = scmp.lt.s32.totalorder %s30, 1
        %s359 = scalar_select %p358, %s30, 1
        %p360 = scmp.lt.s32.totalorder %s31, 0
        %s361 = scalar_select %p360, %s31, 0
        %p362 = scmp.lt.s32.totalorder %s29, 0
        %s363 = scalar_select %p362, %s29, 0
        %s364 = sadd.s32 %s363, %s361
        %s365 = sadd.s32 %s364, %s359
        %s366 = smul.addr %s365, 8
        %s367 = scalar_lea.vmem %s4, %s366
        %p368 = pneg %p186
        %p369 = pneg %p183
        %p370 = pneg %p216
        %p371 = pneg %p213
        %s372 = sand.u32 %s203, 1
        %s373 = scalar_lea.sflag [#allocation5], %s372
        %s374 = sand.u32 %s203, 1
        %s375 = smul.addr %s374, 8
        %s376 = scalar_lea.vmem [#allocation8], %s375
        %p377 = scmp.lt.s32.totalorder %s30, 1
        %s378 = scalar_select %p377, %s30, 1
        %p379 = scmp.lt.s32.totalorder %s29, 0
        %s380 = scalar_select %p379, %s29, 0
        %s381 = sadd.s32 %s380, %s378
        %s382 = smul.addr %s381, 8
        %s383 = scalar_lea.vmem %s0, %s382
        %s384 = smul.u32 16, %s32
        %p385 = scmp.lt.s32.totalorder %s30, 1
        %s386 = scalar_select %p385, %s30, 1
        %p387 = scmp.lt.s32.totalorder %s31, 0
        %s388 = scalar_select %p387, %s31, 0
        %p389 = scmp.lt.s32.totalorder %s32, 0
        %s390 = scalar_select %p389, %s32, 0
        %s391 = sadd.s32 %s390, %s388
        %s392 = sadd.s32 %s391, %s386
        %s393 = scalar_lea.vmem %s3, %s392
        %p394 = scmp.lt.s32.totalorder %s30, 1
        %s395 = scalar_select %p394, %s30, 1
        %p396 = scmp.lt.s32.totalorder %s31, 0
        %s397 = scalar_select %p396, %s31, 0
        %p398 = scmp.lt.s32.totalorder %s29, 0
        %s399 = scalar_select %p398, %s29, 0
        %s400 = sadd.s32 %s399, %s397
        %s401 = sadd.s32 %s400, %s395
        %s402 = smul.addr %s401, 8
        %s403 = scalar_lea.vmem %s4, %s402
        %p404 = scmp.eq.s32.totalorder %s32, 0
        // Predicated region
        $region49: #{tpu_custom_call.1} parent=39 // pred_check
          %p405 = pneg %p404
        $region50: #{tpu_custom_call.1} parent=39 // pred_check_branch
          %407 = sbr.rel (%p405) target = $region52
        $region51: #{tpu_custom_call.1} parent=39 // pred_region
          %v408 = vld [vmem:[%s383] sm:$0xff]
          %v409 = vld [vmem:[#allocation3] sm:$0xff]
          %v410 = vld [vmem:[#allocation3 + $0x8] sm:$0xff]
          %v411 = vld [vmem:[#allocation3 + $0x10] sm:$0xff]
          %v412 = vld [vmem:[#allocation3 + $0x18] sm:$0xff]
          %v413 = vld [vmem:[#allocation3 + $0x20] sm:$0xff]
          %v414 = vld [vmem:[#allocation3 + $0x28] sm:$0xff]
          %v415 = vld [vmem:[#allocation3 + $0x30] sm:$0xff]
          %v416 = vld [vmem:[#allocation3 + $0x38] sm:$0xff]
          %v417 = vld [vmem:[#allocation3 + $0x40] sm:$0xff]
          %v418 = vld [vmem:[#allocation3 + $0x48] sm:$0xff]
          %v419 = vld [vmem:[#allocation3 + $0x50] sm:$0xff]
          %v420 = vld [vmem:[#allocation3 + $0x58] sm:$0xff]
          %v421 = vld [vmem:[#allocation3 + $0x60] sm:$0xff]
          %v422 = vld [vmem:[#allocation3 + $0x68] sm:$0xff]
          %v423 = vld [vmem:[#allocation3 + $0x70] sm:$0xff]
          %v424 = vld [vmem:[#allocation3 + $0x78] sm:$0xff]
          %425 = vmatprep.subr.mxu0 0.0
          %426 = vmatpush1.msra.mxu0 %v424
          %427 = vmatprep.subr.mxu0 0.0
          %428 = vmatpush1.msra.mxu0 %v423
          %429 = vmatprep.subr.mxu0 0.0
          %430 = vmatpush1.msra.mxu0 %v422
          %431 = vmatprep.subr.mxu0 0.0
          %432 = vmatpush1.msra.mxu0 %v421
          %433 = vmatprep.subr.mxu0 0.0
          %434 = vmatpush1.msra.mxu0 %v420
          %435 = vmatprep.subr.mxu0 0.0
          %436 = vmatpush1.msra.mxu0 %v419
          %437 = vmatprep.subr.mxu0 0.0
          %438 = vmatpush1.msra.mxu0 %v418
          %439 = vmatprep.subr.mxu0 0.0
          %440 = vmatpush1.msra.mxu0 %v417
          %441 = vmatprep.subr.mxu0 0.0
          %442 = vmatpush1.msra.mxu0 %v416
          %443 = vmatprep.subr.mxu0 0.0
          %444 = vmatpush1.msra.mxu0 %v415
          %445 = vmatprep.subr.mxu0 0.0
          %446 = vmatpush1.msra.mxu0 %v414
          %447 = vmatprep.subr.mxu0 0.0
          %448 = vmatpush1.msra.mxu0 %v413
          %449 = vmatprep.subr.mxu0 0.0
          %450 = vmatpush1.msra.mxu0 %v412
          %451 = vmatprep.subr.mxu0 0.0
          %452 = vmatpush1.msra.mxu0 %v411
          %453 = vmatprep.subr.mxu0 0.0
          %454 = vmatpush1.msra.mxu0 %v410
          %455 = vmatprep.subr.mxu0 0.0
          %456 = vmatpush1.msra.mxu0 %v409
          %457 = vmatprep.subr.mxu0 0.0
          %458 = vmatpush2.msra.mxu0 0.0
          %459 = vmatprep.subr.mxu0 0.0
          %460 = vmatpush2.msra.mxu0 0.0
          %461 = vmatprep.subr.mxu0 0.0
          %462 = vmatpush2.msra.mxu0 0.0
          %463 = vmatprep.subr.mxu0 0.0
          %464 = vmatpush2.msra.mxu0 0.0
          %465 = vmatprep.subr.mxu0 0.0
          %466 = vmatpush2.msra.mxu0 0.0
          %467 = vmatprep.subr.mxu0 0.0
          %468 = vmatpush2.msra.mxu0 0.0
          %469 = vmatprep.subr.mxu0 0.0
          %470 = vmatpush2.msra.mxu0 0.0
          %471 = vmatprep.subr.mxu0 0.0
          %472 = vmatpush2.msra.mxu0 0.0
          %473 = vmatprep.subr.mxu0 0.0
          %474 = vmatpush2.msra.mxu0 0.0
          %475 = vmatprep.subr.mxu0 0.0
          %476 = vmatpush2.msra.mxu0 0.0
          %477 = vmatprep.subr.mxu0 0.0
          %478 = vmatpush2.msra.mxu0 0.0
          %479 = vmatprep.subr.mxu0 0.0
          %480 = vmatpush2.msra.mxu0 0.0
          %481 = vmatprep.subr.mxu0 0.0
          %482 = vmatpush2.msra.mxu0 0.0
          %483 = vmatprep.subr.mxu0 0.0
          %484 = vmatpush2.msra.mxu0 0.0
          %485 = vmatprep.subr.mxu0 0.0
          %486 = vmatpush2.msra.mxu0 0.0
          %487 = vmatprep.subr.mxu0 0.0
          %488 = vmatpush2.msra.mxu0 0.0
          %489 = vmatprep.mubr.f32.mxu0 0.0
          %490 = vmatmul.mubr.f32.gmra.mxu0 %v408
          %v491 = vpop.f32.mrf.mxu0
          %v492 = vadd.f32 0.0, %v491
          %v493 = vpop.f32.mrf.mxu0
          %494 = vdwg.mxu0
          %495 = vst [vmem:[#allocation2] sm:$0xff] %v492
        $region52: #{tpu_custom_call.1} parent=39 // pred_fallthru
          _
        %v496 = vld [vmem:[%s324] sm:$0xff]
        %v497 = vld [vmem:[%s324 + $0x8] sm:$0xff]
        %v498 = vld [vmem:[%s324 + $0x10] sm:$0xff]
        %v499 = vld [vmem:[%s324 + $0x18] sm:$0xff]
        %v500 = vld [vmem:[%s324 + $0x20] sm:$0xff]
        %v501 = vld [vmem:[%s324 + $0x28] sm:$0xff]
        %v502 = vld [vmem:[%s324 + $0x30] sm:$0xff]
        %v503 = vld [vmem:[%s324 + $0x38] sm:$0xff]
        %v504 = vld [vmem:[%s324 + $0x40] sm:$0xff]
        %v505 = vld [vmem:[%s324 + $0x48] sm:$0xff]
        %v506 = vld [vmem:[%s324 + $0x50] sm:$0xff]
        %v507 = vld [vmem:[%s324 + $0x58] sm:$0xff]
        %v508 = vld [vmem:[%s324 + $0x60] sm:$0xff]
        %v509 = vld [vmem:[%s324 + $0x68] sm:$0xff]
        %v510 = vld [vmem:[%s324 + $0x70] sm:$0xff]
        %v511 = vld [vmem:[%s324 + $0x78] sm:$0xff]
        %v512 = vld [vmem:[#allocation2] sm:$0xff]
        %v513 = vld [vmem:[%s393] sm:$0x1]
        %v515 = vlaneseq
        %v516 = vshrl.u32 %v515, 7
        %v517 = vsub.s32 0, %v516
        %v518 = vrot.slane %v513, %v517
        %520 = vmatprep.subr.mxu0 0.0
        %521 = vmatpush1.xpose.msra.mxu0 %v511
        %522 = vmatprep.subr.mxu0 0.0
        %523 = vmatpush1.xpose.msra.mxu0 %v510
        %524 = vmatprep.subr.mxu0 0.0
        %525 = vmatpush1.xpose.msra.mxu0 %v509
        %526 = vmatprep.subr.mxu0 0.0
        %527 = vmatpush1.xpose.msra.mxu0 %v508
        %528 = vmatprep.subr.mxu0 0.0
        %529 = vmatpush1.xpose.msra.mxu0 %v507
        %530 = vmatprep.subr.mxu0 0.0
        %531 = vmatpush1.xpose.msra.mxu0 %v506
        %532 = vmatprep.subr.mxu0 0.0
        %533 = vmatpush1.xpose.msra.mxu0 %v505
        %534 = vmatprep.subr.mxu0 0.0
        %535 = vmatpush1.xpose.msra.mxu0 %v504
        %536 = vmatprep.subr.mxu0 0.0
        %537 = vmatpush1.xpose.msra.mxu0 %v503
        %538 = vmatprep.subr.mxu0 0.0
        %539 = vmatpush1.xpose.msra.mxu0 %v502
        %540 = vmatprep.subr.mxu0 0.0
        %541 = vmatpush1.xpose.msra.mxu0 %v501
        %542 = vmatprep.subr.mxu0 0.0
        %543 = vmatpush1.xpose.msra.mxu0 %v500
        %544 = vmatprep.subr.mxu0 0.0
        %545 = vmatpush1.xpose.msra.mxu0 %v499
        %546 = vmatprep.subr.mxu0 0.0
        %547 = vmatpush1.xpose.msra.mxu0 %v498
        %548 = vmatprep.subr.mxu0 0.0
        %549 = vmatpush1.xpose.msra.mxu0 %v497
        %550 = vmatprep.subr.mxu0 0.0
        %551 = vmatpush1.xpose.msra.mxu0 %v496
        %552 = vmatprep.subr.mxu0 0.0
        %553 = vmatpush2.xpose.msra.mxu0 0.0
        %554 = vmatprep.subr.mxu0 0.0
        %555 = vmatpush2.xpose.msra.mxu0 0.0
        %556 = vmatprep.subr.mxu0 0.0
        %557 = vmatpush2.xpose.msra.mxu0 0.0
        %558 = vmatprep.subr.mxu0 0.0
        %559 = vmatpush2.xpose.msra.mxu0 0.0
        %560 = vmatprep.subr.mxu0 0.0
        %561 = vmatpush2.xpose.msra.mxu0 0.0
        %562 = vmatprep.subr.mxu0 0.0
        %563 = vmatpush2.xpose.msra.mxu0 0.0
        %564 = vmatprep.subr.mxu0 0.0
        %565 = vmatpush2.xpose.msra.mxu0 0.0
        %566 = vmatprep.subr.mxu0 0.0
        %567 = vmatpush2.xpose.msra.mxu0 0.0
        %568 = vmatprep.subr.mxu0 0.0
        %569 = vmatpush2.xpose.msra.mxu0 0.0
        %570 = vmatprep.subr.mxu0 0.0
        %571 = vmatpush2.xpose.msra.mxu0 0.0
        %572 = vmatprep.subr.mxu0 0.0
        %573 = vmatpush2.xpose.msra.mxu0 0.0
        %574 = vmatprep.subr.mxu0 0.0
        %575 = vmatpush2.xpose.msra.mxu0 0.0
        %576 = vmatprep.subr.mxu0 0.0
        %577 = vmatpush2.xpose.msra.mxu0 0.0
        %578 = vmatprep.subr.mxu0 0.0
        %579 = vmatpush2.xpose.msra.mxu0 0.0
        %580 = vmatprep.subr.mxu0 0.0
        %581 = vmatpush2.xpose.msra.mxu0 0.0
        %582 = vmatprep.subr.mxu0 0.0
        %583 = vmatpush2.xpose.msra.mxu0 0.0
        %584 = vmatprep.mubr.f32.mxu0 0.0
        %585 = vmatmul.mubr.f32.gmra.mxu0 %v512
        %v586 = vpop.f32.mrf.mxu0
        %v587 = vadd.f32 %v518, %v586
        %v588 = vpop.f32.mrf.mxu0
        %589 = vdwg.mxu0
        %v590 = vld [vmem:[%s403] sm:$0xff]
        %592 = vset.pattern.permute.xlu0 0
        %593 = vperm.xlu0 %592, %v590
        %v594 = vpop.permute.xlu0 %593
        %v596 = vadd.f32 %v587, %v594
        %597 = vst [vmem:[%s376] sm:$0xff] %v596
        %s598 = sand.u32 %s203, 1
        %s599 = scalar_lea.sflag [#allocation5], %s598
        %s600 = sand.u32 %s203, 1
        %s601 = smul.addr %s600, 8
        %s602 = scalar_lea.vmem [#allocation8], %s601
        // Predicated region
        $region53: #{tpu_custom_call.1} parent=39 // pred_check
          %p603 = pneg %p213
        $region54: #{tpu_custom_call.1} parent=39 // pred_check_branch
          %605 = sbr.rel (%p603) target = $region56
        $region55: #{tpu_custom_call.1} parent=39 // pred_region
          %s607 = ssub.s32 128, 128
          %608 = vsyncadd %s599, %s607
          %s609 = sadd.s32 %s32, %s29
          %s610 = sadd.s32 %s609, %s30
          %s611 = smul.addr %s610, 128
          %s612 = scalar_lea.hbm %s5, %s611
          %s614 = sshll.u32 %s602, 4
          %s615 = int_to_ptr.vmem [resolvable:$true] %s614
          %617 = dma.vmem_to_hbm [thread:$0]  %s615, 128, %s612, %s599
        $region56: #{tpu_custom_call.1} parent=39 // pred_fallthru
          _
      $region40: #{tpu_custom_call.1} parent=5 // pred_fallthru
        _
      %p618 = scmp.le.s32.totalorder 2, %s18
      // Predicated region
      $region57: #{tpu_custom_call.1} parent=5 // pred_check
        %p619 = pneg %p618
      $region58: #{tpu_custom_call.1} parent=5 // pred_check_branch
        %621 = sbr.rel (%p619) target = $region60
      $region59: #{tpu_custom_call.1} parent=5 // pred_region
        %s622 = ssub.s32 %s18, 2
        // Predicated region
        $region61: #{tpu_custom_call.1} parent=59 // pred_check
          %p623 = pneg %p219
        $region62: #{tpu_custom_call.1} parent=59 // pred_check_branch
          %625 = sbr.rel (%p623) target = $region64
        $region63: #{tpu_custom_call.1} parent=59 // pred_region
          %s626 = sand.u32 %s204, 1
          %s627 = scalar_lea.sflag [#allocation5], %s626
          %s628 = sand.u32 %s204, 1
          %s629 = smul.addr %s628, 8
          %s630 = scalar_lea.vmem [#allocation8], %s629
          %631 = dma.done %s627, 128
        $region64: #{tpu_custom_call.1} parent=59 // pred_fallthru
          _
      $region60: #{tpu_custom_call.1} parent=5 // pred_fallthru
        _
    $region6: #{tpu_custom_call.1} parent=1 // loop_footer
      %s22 = sadd.s32 1, %s18
    $region7: #{tpu_custom_call.1} parent=1 // loop_footer_branch
      %17 = sbr.rel target = $region3
    $region8: #{tpu_custom_call.1} parent=1 // loop_exit
      _
    %632 = vsyncpa [#allocation4], 1
    %s633 = scalar_lea.sflag [#allocation4], 1
    %634 = vsyncpa %s633, 1
    %635 = vsyncpa [#allocation7], 1
    %s636 = scalar_lea.sflag [#allocation7], 1
    %637 = vsyncpa %s636, 1
    %638 = vsyncpa [#allocation5], 1
    %s639 = scalar_lea.sflag [#allocation5], 1
    %640 = vsyncpa %s639, 1

</llo_original>
